<compile_context>
chip_gen: v7x
topology: tpu7x:2x2x1
jax: 0.10.0
libtpu: 0.0.40
codegen_flags: <defaults>
</compile_context>

<pallas_src>
import functools

import jax
import jax.numpy as jnp
from jax.experimental import pallas as pl
from jax.experimental.pallas import tpu as pltpu


def _model_kernel(a_ref, p_ref, n_ref,           # (TB, F*H) each
                  wa_ref, wb_ref,                 # folded weights: (F*H, 2D) each
                  b_comb_ref,                     # (1, 2D)  combined bias (f32)
                  w_fc2_row_ref,                  # (1, 2D)  fc2 weight as a lane row (f32)
                  b_fc2_ref,                      # SMEM scalar: (1, 1)
                  out_ref):                       # (TB, 2)  [:,0]=ap_dis  [:,1]=an_dis
    # One folded MXU stage per stream (encoder + fc1 fused into the weights).
    a_proj = jnp.dot(a_ref[...], wa_ref[...], preferred_element_type=jnp.float32)  # (TB, 2D)
    p_proj = jnp.dot(p_ref[...], wb_ref[...], preferred_element_type=jnp.float32)  # (TB, 2D)
    n_proj = jnp.dot(n_ref[...], wb_ref[...], preferred_element_type=jnp.float32)  # (TB, 2D)

    b_comb = b_comb_ref[...]          # (1, 2D)
    w2 = w_fc2_row_ref[...]           # (1, 2D)
    b2 = b_fc2_ref[0, 0]              # scalar from SMEM

    # Shared anchor projection reused for both heads — no in-kernel concat.
    h_ap = jnp.maximum(a_proj + p_proj + b_comb, 0.0)   # relu, (TB, 2D)
    h_an = jnp.maximum(a_proj + n_proj + b_comb, 0.0)

    # fc2 (width 1) as VPU multiply + lane reduction; sigmoid rides the EUP slot.
    z_ap = jnp.sum(h_ap * w2, axis=-1, keepdims=True) + b2   # (TB, 1)
    z_an = jnp.sum(h_an * w2, axis=-1, keepdims=True) + b2

    # TODO(synk): output last-dim is 2 (< 128 lanes) -> masked store; bytes are
    # negligible vs. the F*H-wide inputs, so lane-dense repacking is skipped.
    out_ref[:, 0:1] = jax.nn.sigmoid(z_ap)
    out_ref[:, 1:2] = jax.nn.sigmoid(z_an)


@functools.partial(jax.jit, static_argnames=("use_bf16", "tb_target"))
def model_forward(anchor, positive, negative, params, *, use_bf16=False, tb_target=1024):
    """anchor/positive/negative: (B, F, H) float32. Returns (ap_dis, an_dis), each (B, 1)."""
    B, F, H_in = anchor.shape
    FH = F * H_in

    (w_mlp, b_mlp, w_dense, b_dense, w_fc1, b_fc1, w_fc2, b_fc2) = params
    H = w_dense.shape[0]
    D2 = w_fc1.shape[1]                 # 2 * d_size

    # ---- Fold the activation-free linear chain at trace time (tiny XLA matmuls) ----
    #   enc(x)       = x @ (w_mlp @ w_dense) + (b_mlp @ w_dense + b_dense)
    #   fc1(cat(a,b))= a @ Wa + b @ Wb + b_comb
    w_enc = w_mlp @ w_dense                          # (F*H, H)
    b_enc = b_mlp @ w_dense + b_dense                # (1, H)
    w_fc1_a, w_fc1_b = w_fc1[:H], w_fc1[H:]          # (H, 2D) each
    wa = w_enc @ w_fc1_a                             # (F*H, 2D)
    wb = w_enc @ w_fc1_b                             # (F*H, 2D)
    b_comb = b_enc @ (w_fc1_a + w_fc1_b) + b_fc1     # (1, 2D)

    a = anchor.reshape(B, FH)
    p = positive.reshape(B, FH)
    n = negative.reshape(B, FH)

    in_dtype = jnp.bfloat16 if use_bf16 else jnp.float32
    a, p, n = a.astype(in_dtype), p.astype(in_dtype), n.astype(in_dtype)
    wa, wb = wa.astype(in_dtype), wb.astype(in_dtype)

    b_comb = b_comb.astype(jnp.float32)
    w_fc2_row = w_fc2.reshape(1, -1).astype(jnp.float32)   # (1, 2D) lane row for VPU reduce
    b_fc2_s = b_fc2.reshape(1, 1).astype(jnp.float32)      # true scalar -> SMEM

    # ---- Batch grid (parallel): pipelined, VMEM-bounded, shards across v7x's 2 TCs ----
    TB = B if B <= tb_target else tb_target          # tb_target is a multiple of 8
    grid = (pl.cdiv(B, TB),)

    in_itemsize = jnp.dtype(in_dtype).itemsize
    vmem_needed = (2 * (3 * TB * FH * in_itemsize + TB * 2 * 4)      # double-buffered I/O tiles
                   + 2 * FH * D2 * in_itemsize + 3 * D2 * 4          # resident weights / biases
                   + (1 << 20))                                      # slack
    vmem_limit = int(min(max(vmem_needed, 16 << 20), 48 << 20))

    row_spec = pl.BlockSpec((TB, FH), lambda i: (i, 0))
    w_spec = pl.BlockSpec((FH, D2), lambda i: (0, 0))        # constant block -> stays resident
    bias_spec = pl.BlockSpec((1, D2), lambda i: (0, 0))
    smem_spec = pl.BlockSpec(memory_space=pltpu.MemorySpace.SMEM)

    out = pl.pallas_call(
        _model_kernel,
        out_shape=jax.ShapeDtypeStruct((B, 2), jnp.float32),
        grid_spec=pltpu.PrefetchScalarGridSpec(
            num_scalar_prefetch=0,
            grid=grid,
            in_specs=[row_spec, row_spec, row_spec,          # a, p, n
                      w_spec, w_spec,                        # Wa, Wb
                      bias_spec,                             # b_comb
                      bias_spec,                             # w_fc2 row
                      smem_spec],                            # b_fc2 scalar
            out_specs=pl.BlockSpec((TB, 2), lambda i: (i, 0)),
        ),
        compiler_params=pltpu.CompilerParams(
            dimension_semantics=("parallel",),
            vmem_limit_bytes=vmem_limit),
    )(a, p, n, wa, wb, b_comb, w_fc2_row, b_fc2_s)

    return out[:, 0:1], out[:, 1:2]


def init_params(key, hidden_size, filter_size, d_size):
    """Deterministic init; weights stored as (in_features, out_features)."""
    H, F, D = hidden_size, filter_size, d_size
    ks = jax.random.split(key, 8)

    def lin(kw, kb, fan_in, fan_out):
        bound = 1.0 / jnp.sqrt(float(fan_in))
        w = jax.random.uniform(kw, (fan_in, fan_out), jnp.float32, -bound, bound)
        b = jax.random.uniform(kb, (1, fan_out), jnp.float32, -bound, bound)
        return w, b

    w_mlp, b_mlp = lin(ks[0], ks[1], F * H, H)        # MLPFuse.linear_mlp
    w_dense, b_dense = lin(ks[2], ks[3], H, H)        # MLPFuse.dense
    w_fc1, b_fc1 = lin(ks[4], ks[5], 2 * H, 2 * D)    # DistanceClassifier.fc1
    w_fc2, b_fc2 = lin(ks[6], ks[7], 2 * D, 1)        # DistanceClassifier.fc2
    return (w_mlp, b_mlp, w_dense, b_dense, w_fc1, b_fc1, w_fc2, b_fc2)


def reference_forward(anchor, positive, negative, params):
    """Pure-JAX reference of the PyTorch forward (dropout = identity)."""
    (w_mlp, b_mlp, w_dense, b_dense, w_fc1, b_fc1, w_fc2, b_fc2) = params
    B = anchor.shape[0]

    def enc(x):
        x = x.reshape(B, -1)
        x = x @ w_mlp + b_mlp
        return x @ w_dense + b_dense

    def dist(a, b):
        x = jnp.concatenate([a, b], axis=1)
        h = jnp.maximum(x @ w_fc1 + b_fc1, 0.0)
        return jax.nn.sigmoid(h @ w_fc2 + b_fc2)

    a, p, n = enc(anchor), enc(positive), enc(negative)
    return dist(a, p), dist(a, n)


if __name__ == "__main__":
    B = 2            # batch
    F = 8            # args.filter_size (sequence length of seq_embeds)
    H = 32           # config.hidden_size
    D = 16           # args.d_size  -> DistanceClassifier hidden = 2*D = 32

    key = jax.random.PRNGKey(0)
    k_an, k_po, k_ne, k_params = jax.random.split(key, 4)

    anchor = jax.random.normal(k_an, (B, F, H), jnp.float32)
    positive = jax.random.normal(k_po, (B, F, H), jnp.float32)
    negative = jax.random.normal(k_ne, (B, F, H), jnp.float32)

    params = init_params(k_params, H, F, D)
    ap_ref, an_ref = reference_forward(anchor, positive, negative, params)

    # f32 path (weight folding reassociates f32 matmuls -> 1e-4 tolerance).
    ap_dis, an_dis = model_forward(anchor, positive, negative, params)
    jax.block_until_ready((ap_dis, an_dis))
    assert ap_dis.shape == (B, 1) and an_dis.shape == (B, 1)
    assert jnp.allclose(ap_dis, ap_ref, atol=1e-4, rtol=1e-4)
    assert jnp.allclose(an_dis, an_ref, atol=1e-4, rtol=1e-4)

    # bf16-stream path (halves HBM/VMEM traffic; elementwise math stays f32).
    ap_bf, an_bf = model_forward(anchor, positive, negative, params, use_bf16=True)
    jax.block_until_ready((ap_bf, an_bf))
    assert jnp.allclose(ap_bf, ap_ref, atol=2e-2)
    assert jnp.allclose(an_bf, an_ref, atol=2e-2)

    print("KERNEL_OK")
</pallas_src>

<mosaic_0001>
module attributes {stable_mosaic.version = 11 : i64} {
  func.func @_model_kernel(%arg0: i32, %arg1: memref<2x256xf32, #tpu.memory_space<vmem>>, %arg2: memref<2x256xf32, #tpu.memory_space<vmem>>, %arg3: memref<2x256xf32, #tpu.memory_space<vmem>>, %arg4: memref<256x32xf32, #tpu.memory_space<vmem>>, %arg5: memref<256x32xf32, #tpu.memory_space<vmem>>, %arg6: memref<1x32xf32, #tpu.memory_space<vmem>>, %arg7: memref<1x32xf32, #tpu.memory_space<vmem>>, %arg8: memref<1x1xf32, #tpu.memory_space<smem>>, %arg9: memref<2x2xf32, #tpu.memory_space<vmem>>) attributes {dimension_semantics = [#tpu.dimension_semantics<parallel>], iteration_bounds = array<i64: 1>, scalar_prefetch = 0 : i64, scratch_operands = 0 : i64, tpu.core_type = #tpu.core_type<tc>, window_params = [{transform_indices = @transform_0, window_bounds = array<i64: 2, 256>}, {transform_indices = @transform_1, window_bounds = array<i64: 2, 256>}, {transform_indices = @transform_2, window_bounds = array<i64: 2, 256>}, {pipeline_mode = #tpu.pipeline_mode<synchronous>, transform_indices = @transform_3, window_bounds = array<i64: 256, 32>}, {pipeline_mode = #tpu.pipeline_mode<synchronous>, transform_indices = @transform_4, window_bounds = array<i64: 256, 32>}, {pipeline_mode = #tpu.pipeline_mode<synchronous>, transform_indices = @transform_5, window_bounds = array<i64: 1, 32>}, {pipeline_mode = #tpu.pipeline_mode<synchronous>, transform_indices = @transform_6, window_bounds = array<i64: 1, 32>}, {transform_indices = @transform_7, window_bounds = array<i64: 1, 1>}, {transform_indices = @transform_8, window_bounds = array<i64: 2, 2>}]} {
    %c0 = arith.constant 0 : index
    %c0_0 = arith.constant 0 : index
    %0 = vector.load %arg1[%c0, %c0_0] : memref<2x256xf32, #tpu.memory_space<vmem>>, vector<2x256xf32>
    %c0_1 = arith.constant 0 : index
    %c0_2 = arith.constant 0 : index
    %1 = vector.load %arg4[%c0_1, %c0_2] : memref<256x32xf32, #tpu.memory_space<vmem>>, vector<256x32xf32>
    %cst = arith.constant dense<0.000000e+00> : vector<2x32xf32>
    %2 = tpu.matmul %0, %1, %cst {dimension_numbers = #tpu.dot_dimension_numbers<[1], [0], [0], [1], [0, 0, 1, 1], [], []>} : vector<2x256xf32>, vector<256x32xf32>, vector<2x32xf32> -> vector<2x32xf32>
    %c0_3 = arith.constant 0 : index
    %c0_4 = arith.constant 0 : index
    %3 = vector.load %arg2[%c0_3, %c0_4] : memref<2x256xf32, #tpu.memory_space<vmem>>, vector<2x256xf32>
    %c0_5 = arith.constant 0 : index
    %c0_6 = arith.constant 0 : index
    %4 = vector.load %arg5[%c0_5, %c0_6] : memref<256x32xf32, #tpu.memory_space<vmem>>, vector<256x32xf32>
    %cst_7 = arith.constant dense<0.000000e+00> : vector<2x32xf32>
    %5 = tpu.matmul %3, %4, %cst_7 {dimension_numbers = #tpu.dot_dimension_numbers<[1], [0], [0], [1], [0, 0, 1, 1], [], []>} : vector<2x256xf32>, vector<256x32xf32>, vector<2x32xf32> -> vector<2x32xf32>
    %c0_8 = arith.constant 0 : index
    %c0_9 = arith.constant 0 : index
    %6 = vector.load %arg3[%c0_8, %c0_9] : memref<2x256xf32, #tpu.memory_space<vmem>>, vector<2x256xf32>
    %c0_10 = arith.constant 0 : index
    %c0_11 = arith.constant 0 : index
    %7 = vector.load %arg5[%c0_10, %c0_11] : memref<256x32xf32, #tpu.memory_space<vmem>>, vector<256x32xf32>
    %cst_12 = arith.constant dense<0.000000e+00> : vector<2x32xf32>
    %8 = tpu.matmul %6, %7, %cst_12 {dimension_numbers = #tpu.dot_dimension_numbers<[1], [0], [0], [1], [0, 0, 1, 1], [], []>} : vector<2x256xf32>, vector<256x32xf32>, vector<2x32xf32> -> vector<2x32xf32>
    %c0_13 = arith.constant 0 : index
    %c0_14 = arith.constant 0 : index
    %9 = vector.load %arg6[%c0_13, %c0_14] : memref<1x32xf32, #tpu.memory_space<vmem>>, vector<1x32xf32>
    %c0_15 = arith.constant 0 : index
    %c0_16 = arith.constant 0 : index
    %10 = vector.load %arg7[%c0_15, %c0_16] : memref<1x32xf32, #tpu.memory_space<vmem>>, vector<1x32xf32>
    %c0_17 = arith.constant 0 : index
    %c0_18 = arith.constant 0 : index
    %11 = memref.load %arg8[%c0_17, %c0_18] : memref<1x1xf32, #tpu.memory_space<smem>>
    %12 = arith.addf %2, %5 : vector<2x32xf32>
    %13 = vector.broadcast %9 : vector<1x32xf32> to vector<2x32xf32>
    %14 = arith.addf %12, %13 : vector<2x32xf32>
    %cst_19 = arith.constant 0.000000e+00 : f32
    %15 = vector.broadcast %cst_19 : f32 to vector<2x32xf32>
    %16 = arith.maximumf %14, %15 : vector<2x32xf32>
    %17 = arith.addf %2, %8 : vector<2x32xf32>
    %18 = vector.broadcast %9 : vector<1x32xf32> to vector<2x32xf32>
    %19 = arith.addf %17, %18 : vector<2x32xf32>
    %cst_20 = arith.constant 0.000000e+00 : f32
    %20 = vector.broadcast %cst_20 : f32 to vector<2x32xf32>
    %21 = arith.maximumf %19, %20 : vector<2x32xf32>
    %22 = vector.broadcast %10 : vector<1x32xf32> to vector<2x32xf32>
    %23 = arith.mulf %16, %22 : vector<2x32xf32>
    %cst_21 = arith.constant dense<0.000000e+00> : vector<2xf32>
    %24 = vector.multi_reduction <add>, %23, %cst_21 [1] : vector<2x32xf32> to vector<2xf32>
    %25 = vector.shape_cast %24 : vector<2xf32> to vector<2x1xf32>
    %26 = vector.broadcast %11 : f32 to vector<2x1xf32>
    %27 = arith.addf %25, %26 : vector<2x1xf32>
    %28 = vector.broadcast %10 : vector<1x32xf32> to vector<2x32xf32>
    %29 = arith.mulf %21, %28 : vector<2x32xf32>
    %cst_22 = arith.constant dense<0.000000e+00> : vector<2xf32>
    %30 = vector.multi_reduction <add>, %29, %cst_22 [1] : vector<2x32xf32> to vector<2xf32>
    %31 = vector.shape_cast %30 : vector<2xf32> to vector<2x1xf32>
    %32 = vector.broadcast %11 : f32 to vector<2x1xf32>
    %33 = arith.addf %31, %32 : vector<2x1xf32>
    %34 = arith.negf %27 : vector<2x1xf32>
    %35 = math.exp %34 : vector<2x1xf32>
    %cst_23 = arith.constant 1.000000e+00 : f32
    %36 = vector.broadcast %cst_23 : f32 to vector<2x1xf32>
    %37 = arith.addf %36, %35 : vector<2x1xf32>
    %38 = arith.divf %36, %37 : vector<2x1xf32>
    %c0_24 = arith.constant 0 : index
    %c0_25 = arith.constant 0 : index
    %39 = vector.load %arg9[%c0_24, %c0_25] : memref<2x2xf32, #tpu.memory_space<vmem>>, vector<2x1xf32>
    tpu.vector_store %arg9[%c0_24, %c0_25], %38 {strides = array<i32>} : memref<2x2xf32, #tpu.memory_space<vmem>>, vector<2x1xf32>,
    %40 = arith.negf %33 : vector<2x1xf32>
    %41 = math.exp %40 : vector<2x1xf32>
    %cst_26 = arith.constant 1.000000e+00 : f32
    %42 = vector.broadcast %cst_26 : f32 to vector<2x1xf32>
    %43 = arith.addf %42, %41 : vector<2x1xf32>
    %44 = arith.divf %42, %43 : vector<2x1xf32>
    %c0_27 = arith.constant 0 : index
    %c1 = arith.constant 1 : index
    %45 = vector.load %arg9[%c0_27, %c1] : memref<2x2xf32, #tpu.memory_space<vmem>>, vector<2x1xf32>
    tpu.vector_store %arg9[%c0_27, %c1], %44 {strides = array<i32>} : memref<2x2xf32, #tpu.memory_space<vmem>>, vector<2x1xf32>,
    return
  }
  func.func @transform_0(%arg0: i32) -> (i32, i32) {
    %c0_i32 = arith.constant 0 : i32
    %c0_i32_0 = arith.constant 0 : i32
    return %arg0, %c0_i32 : i32, i32
  }
  func.func @transform_1(%arg0: i32) -> (i32, i32) {
    %c0_i32 = arith.constant 0 : i32
    %c0_i32_0 = arith.constant 0 : i32
    return %arg0, %c0_i32 : i32, i32
  }
  func.func @transform_2(%arg0: i32) -> (i32, i32) {
    %c0_i32 = arith.constant 0 : i32
    %c0_i32_0 = arith.constant 0 : i32
    return %arg0, %c0_i32 : i32, i32
  }
  func.func @transform_3(%arg0: i32) -> (i32, i32) {
    %c0_i32 = arith.constant 0 : i32
    %c0_i32_0 = arith.constant 0 : i32
    %c0_i32_1 = arith.constant 0 : i32
    return %c0_i32, %c0_i32_0 : i32, i32
  }
  func.func @transform_4(%arg0: i32) -> (i32, i32) {
    %c0_i32 = arith.constant 0 : i32
    %c0_i32_0 = arith.constant 0 : i32
    %c0_i32_1 = arith.constant 0 : i32
    return %c0_i32, %c0_i32_0 : i32, i32
  }
  func.func @transform_5(%arg0: i32) -> (i32, i32) {
    %c0_i32 = arith.constant 0 : i32
    %c0_i32_0 = arith.constant 0 : i32
    %c0_i32_1 = arith.constant 0 : i32
    return %c0_i32, %c0_i32_0 : i32, i32
  }
  func.func @transform_6(%arg0: i32) -> (i32, i32) {
    %c0_i32 = arith.constant 0 : i32
    %c0_i32_0 = arith.constant 0 : i32
    %c0_i32_1 = arith.constant 0 : i32
    return %c0_i32, %c0_i32_0 : i32, i32
  }
  func.func @transform_7(%arg0: i32) -> (i32, i32) {
    %c0_i32 = arith.constant 0 : i32
    %c0_i32_0 = arith.constant 0 : i32
    %c0_i32_1 = arith.constant 0 : i32
    return %c0_i32, %c0_i32_0 : i32, i32
  }
  func.func @transform_8(%arg0: i32) -> (i32, i32) {
    %c0_i32 = arith.constant 0 : i32
    %c0_i32_0 = arith.constant 0 : i32
    return %arg0, %c0_i32 : i32, i32
  }
}

</mosaic_0001>

<llo_original>
// kernel: model_forward.1
$region0: #{model_forward.1}
  #allocation0 [shape = 'u32[]', space=smem, size = 0x4, offset = 0x4, fixed_abs, tag = 'smem constant byte address 0x4 - core index']
  #allocation1 [shape = 'u32[144,128]{1,0:T(1,128)}', space=vmem, size = 0x12000, scoped, tag = 'internal scratch']
  #allocation2 [shape = 'f32[1,1]{1,0:T(1,128)S(6)}', space=smem, size = 0x200, scoped, tag = 'scoped memory for model_forward.1']
  %s0 = inlined_call_operand.vmem [shape: f32[2,256], index: 0, kind: input, shape index: {}]
  %s1 = inlined_call_operand.vmem [shape: f32[2,256], index: 1, kind: input, shape index: {}]
  %s2 = inlined_call_operand.vmem [shape: f32[2,256], index: 2, kind: input, shape index: {}]
  %s3 = inlined_call_operand.vmem [shape: f32[256,32], index: 3, kind: input, shape index: {}]
  %s4 = inlined_call_operand.vmem [shape: f32[256,32], index: 4, kind: input, shape index: {}]
  %s5 = inlined_call_operand.vmem [shape: f32[1,32], index: 5, kind: input, shape index: {}]
  %s6 = inlined_call_operand.vmem [shape: f32[1,32], index: 6, kind: input, shape index: {}]
  %s7 = inlined_call_operand.<no memory space> [shape: f32[1,1], index: 7, kind: input, shape index: {}]
  %s8 = inlined_call_operand.vmem [shape: f32[2,2], index: 8, kind: output, shape index: {}]
  %s9 = sld [smem:[#allocation0]]
  $region42: #{model_forward.1} parent=0
    _
  %s11 = ssub.s32 1, %s9
  %s12 = scalar_select 0, %s11, %s9
  %13 = sst [smem:[#allocation2]] %s7
  // Predicated region
  $region2: #{model_forward.1} parent=0 // pred_check
    _
  $region3: #{model_forward.1} parent=0 // pred_check_branch
    %15 = sbr.rel (0) target = $region5
  $region4: #{model_forward.1} parent=0 // pred_region
    _
  $region5: #{model_forward.1} parent=0 // pred_fallthru
    _
  // Predicated region
  $region6: #{model_forward.1} parent=0 // pred_check
    _
  $region7: #{model_forward.1} parent=0 // pred_check_branch
    %17 = sbr.rel (0) target = $region9
  $region8: #{model_forward.1} parent=0 // pred_region
    _
  $region9: #{model_forward.1} parent=0 // pred_fallthru
    _
  // Predicated region
  $region10: #{model_forward.1} parent=0 // pred_check
    _
  $region11: #{model_forward.1} parent=0 // pred_check_branch
    %19 = sbr.rel (0) target = $region13
  $region12: #{model_forward.1} parent=0 // pred_region
    _
  $region13: #{model_forward.1} parent=0 // pred_fallthru
    _
  // Predicated region
  $region14: #{model_forward.1} parent=0 // pred_check
    _
  $region15: #{model_forward.1} parent=0 // pred_check_branch
    %21 = sbr.rel (0) target = $region17
  $region16: #{model_forward.1} parent=0 // pred_region
    _
  $region17: #{model_forward.1} parent=0 // pred_fallthru
    _
  // Predicated region
  $region18: #{model_forward.1} parent=0 // pred_check
    _
  $region19: #{model_forward.1} parent=0 // pred_check_branch
    %23 = sbr.rel (0) target = $region21
  $region20: #{model_forward.1} parent=0 // pred_region
    _
  $region21: #{model_forward.1} parent=0 // pred_fallthru
    _
  // Predicated region
  $region22: #{model_forward.1} parent=0 // pred_check
    _
  $region23: #{model_forward.1} parent=0 // pred_check_branch
    %25 = sbr.rel (0) target = $region25
  $region24: #{model_forward.1} parent=0 // pred_region
    _
  $region25: #{model_forward.1} parent=0 // pred_fallthru
    _
  // Predicated region
  $region26: #{model_forward.1} parent=0 // pred_check
    _
  $region27: #{model_forward.1} parent=0 // pred_check_branch
    %27 = sbr.rel (0) target = $region29
  $region28: #{model_forward.1} parent=0 // pred_region
    _
  $region29: #{model_forward.1} parent=0 // pred_fallthru
    _
  // Predicated region
  $region30: #{model_forward.1} parent=0 // pred_check
    _
  $region31: #{model_forward.1} parent=0 // pred_check_branch
    %29 = sbr.rel (0) target = $region33
  $region32: #{model_forward.1} parent=0 // pred_region
    _
  $region33: #{model_forward.1} parent=0 // pred_fallthru
    _
  %v30 = vld [vmem:[%s0] sm:$0xf]
  %v31 = vld [vmem:[%s3] sm:$0xff]
  %v32 = vld [vmem:[%s3 + $0x8] sm:$0xff]
  %v33 = vld [vmem:[%s3 + $0x10] sm:$0xff]
  %v34 = vld [vmem:[%s3 + $0x18] sm:$0xff]
  %v35 = vld [vmem:[%s3 + $0x20] sm:$0xff]
  %v36 = vld [vmem:[%s3 + $0x28] sm:$0xff]
  %v37 = vld [vmem:[%s3 + $0x30] sm:$0xff]
  %v38 = vld [vmem:[%s3 + $0x38] sm:$0xff]
  %v39 = vld [vmem:[%s3 + $0x40] sm:$0xff]
  %v40 = vld [vmem:[%s3 + $0x48] sm:$0xff]
  %v41 = vld [vmem:[%s3 + $0x50] sm:$0xff]
  %v42 = vld [vmem:[%s3 + $0x58] sm:$0xff]
  %v43 = vld [vmem:[%s3 + $0x60] sm:$0xff]
  %v44 = vld [vmem:[%s3 + $0x68] sm:$0xff]
  %v45 = vld [vmem:[%s3 + $0x70] sm:$0xff]
  %v46 = vld [vmem:[%s3 + $0x78] sm:$0xff]
  %v47 = vld [vmem:[%s3 + $0x80] sm:$0xff]
  %v48 = vld [vmem:[%s3 + $0x88] sm:$0xff]
  %v49 = vld [vmem:[%s3 + $0x90] sm:$0xff]
  %v50 = vld [vmem:[%s3 + $0x98] sm:$0xff]
  %v51 = vld [vmem:[%s3 + $0xa0] sm:$0xff]
  %v52 = vld [vmem:[%s3 + $0xa8] sm:$0xff]
  %v53 = vld [vmem:[%s3 + $0xb0] sm:$0xff]
  %v54 = vld [vmem:[%s3 + $0xb8] sm:$0xff]
  %v55 = vld [vmem:[%s3 + $0xc0] sm:$0xff]
  %v56 = vld [vmem:[%s3 + $0xc8] sm:$0xff]
  %v57 = vld [vmem:[%s3 + $0xd0] sm:$0xff]
  %v58 = vld [vmem:[%s3 + $0xd8] sm:$0xff]
  %v59 = vld [vmem:[%s3 + $0xe0] sm:$0xff]
  %v60 = vld [vmem:[%s3 + $0xe8] sm:$0xff]
  %v61 = vld [vmem:[%s3 + $0xf0] sm:$0xff]
  %v62 = vld [vmem:[%s3 + $0xf8] sm:$0xff]
  %v65 = vunpack.c.l.s4 1983009808
  %v66 = vunpack.c.0.s8 %v65
  %v67 = vlaneseq
  %v68 = vshrl.u32 %v67, 7
  %v69 = vsub.s32 %v66, %v68
  %v70 = vrot.slane %v30, %v69
  %v71 = vcombine.high %v70, %v70
  %74 = vmatprep.subr.mxu0 0.0
  %75 = vmatpush1.msra.mxu0 %v31
  %76 = vmatprep.subr.mxu0 0.0
  %77 = vmatpush1.msra.mxu0 %v32
  %78 = vmatprep.subr.mxu0 0.0
  %79 = vmatpush1.msra.mxu0 %v33
  %80 = vmatprep.subr.mxu0 0.0
  %81 = vmatpush1.msra.mxu0 %v34
  %82 = vmatprep.subr.mxu0 0.0
  %83 = vmatpush1.msra.mxu0 %v35
  %84 = vmatprep.subr.mxu0 0.0
  %85 = vmatpush1.msra.mxu0 %v36
  %86 = vmatprep.subr.mxu0 0.0
  %87 = vmatpush1.msra.mxu0 %v37
  %88 = vmatprep.subr.mxu0 0.0
  %89 = vmatpush1.msra.mxu0 %v38
  %90 = vmatprep.subr.mxu0 0.0
  %91 = vmatpush1.msra.mxu0 %v39
  %92 = vmatprep.subr.mxu0 0.0
  %93 = vmatpush1.msra.mxu0 %v40
  %94 = vmatprep.subr.mxu0 0.0
  %95 = vmatpush1.msra.mxu0 %v41
  %96 = vmatprep.subr.mxu0 0.0
  %97 = vmatpush1.msra.mxu0 %v42
  %98 = vmatprep.subr.mxu0 0.0
  %99 = vmatpush1.msra.mxu0 %v43
  %100 = vmatprep.subr.mxu0 0.0
  %101 = vmatpush1.msra.mxu0 %v44
  %102 = vmatprep.subr.mxu0 0.0
  %103 = vmatpush1.msra.mxu0 %v45
  %104 = vmatprep.subr.mxu0 0.0
  %105 = vmatpush1.msra.mxu0 %v46
  %106 = vmatprep.subr.mxu0 0.0
  %107 = vmatpush1.msra.mxu0 %v47
  %108 = vmatprep.subr.mxu0 0.0
  %109 = vmatpush1.msra.mxu0 %v48
  %110 = vmatprep.subr.mxu0 0.0
  %111 = vmatpush1.msra.mxu0 %v49
  %112 = vmatprep.subr.mxu0 0.0
  %113 = vmatpush1.msra.mxu0 %v50
  %114 = vmatprep.subr.mxu0 0.0
  %115 = vmatpush1.msra.mxu0 %v51
  %116 = vmatprep.subr.mxu0 0.0
  %117 = vmatpush1.msra.mxu0 %v52
  %118 = vmatprep.subr.mxu0 0.0
  %119 = vmatpush1.msra.mxu0 %v53
  %120 = vmatprep.subr.mxu0 0.0
  %121 = vmatpush1.msra.mxu0 %v54
  %122 = vmatprep.subr.mxu0 0.0
  %123 = vmatpush1.msra.mxu0 %v55
  %124 = vmatprep.subr.mxu0 0.0
  %125 = vmatpush1.msra.mxu0 %v56
  %126 = vmatprep.subr.mxu0 0.0
  %127 = vmatpush1.msra.mxu0 %v57
  %128 = vmatprep.subr.mxu0 0.0
  %129 = vmatpush1.msra.mxu0 %v58
  %130 = vmatprep.subr.mxu0 0.0
  %131 = vmatpush1.msra.mxu0 %v59
  %132 = vmatprep.subr.mxu0 0.0
  %133 = vmatpush1.msra.mxu0 %v60
  %134 = vmatprep.subr.mxu0 0.0
  %135 = vmatpush1.msra.mxu0 %v61
  %136 = vmatprep.subr.mxu0 0.0
  %137 = vmatpush1.msra.mxu0 %v62
  %138 = vmatprep.mubr.f32.mxu0 %v71
  %139 = vmatmul.mubr.f32.gmra.mrb[0].mxu0 %v70
  %v140 = vpop.f32.mrb[0].mxu0
  %v141 = vadd.f32 0.0, %v140
  %v142 = vpop.f32.mrb[0].mxu0
  %143 = vdwg.mxu0
  %v144 = vld [vmem:[%s1] sm:$0xf]
  %v145 = vld [vmem:[%s4] sm:$0xff]
  %v146 = vld [vmem:[%s4 + $0x8] sm:$0xff]
  %v147 = vld [vmem:[%s4 + $0x10] sm:$0xff]
  %v148 = vld [vmem:[%s4 + $0x18] sm:$0xff]
  %v149 = vld [vmem:[%s4 + $0x20] sm:$0xff]
  %v150 = vld [vmem:[%s4 + $0x28] sm:$0xff]
  %v151 = vld [vmem:[%s4 + $0x30] sm:$0xff]
  %v152 = vld [vmem:[%s4 + $0x38] sm:$0xff]
  %v153 = vld [vmem:[%s4 + $0x40] sm:$0xff]
  %v154 = vld [vmem:[%s4 + $0x48] sm:$0xff]
  %v155 = vld [vmem:[%s4 + $0x50] sm:$0xff]
  %v156 = vld [vmem:[%s4 + $0x58] sm:$0xff]
  %v157 = vld [vmem:[%s4 + $0x60] sm:$0xff]
  %v158 = vld [vmem:[%s4 + $0x68] sm:$0xff]
  %v159 = vld [vmem:[%s4 + $0x70] sm:$0xff]
  %v160 = vld [vmem:[%s4 + $0x78] sm:$0xff]
  %v161 = vld [vmem:[%s4 + $0x80] sm:$0xff]
  %v162 = vld [vmem:[%s4 + $0x88] sm:$0xff]
  %v163 = vld [vmem:[%s4 + $0x90] sm:$0xff]
  %v164 = vld [vmem:[%s4 + $0x98] sm:$0xff]
  %v165 = vld [vmem:[%s4 + $0xa0] sm:$0xff]
  %v166 = vld [vmem:[%s4 + $0xa8] sm:$0xff]
  %v167 = vld [vmem:[%s4 + $0xb0] sm:$0xff]
  %v168 = vld [vmem:[%s4 + $0xb8] sm:$0xff]
  %v169 = vld [vmem:[%s4 + $0xc0] sm:$0xff]
  %v170 = vld [vmem:[%s4 + $0xc8] sm:$0xff]
  %v171 = vld [vmem:[%s4 + $0xd0] sm:$0xff]
  %v172 = vld [vmem:[%s4 + $0xd8] sm:$0xff]
  %v173 = vld [vmem:[%s4 + $0xe0] sm:$0xff]
  %v174 = vld [vmem:[%s4 + $0xe8] sm:$0xff]
  %v175 = vld [vmem:[%s4 + $0xf0] sm:$0xff]
  %v176 = vld [vmem:[%s4 + $0xf8] sm:$0xff]
  %v179 = vunpack.c.l.s4 1983009808
  %v180 = vunpack.c.0.s8 %v179
  %v181 = vlaneseq
  %v182 = vshrl.u32 %v181, 7
  %v183 = vsub.s32 %v180, %v182
  %v184 = vrot.slane %v144, %v183
  %v185 = vcombine.high %v184, %v184
  %188 = vmatprep.subr.mxu0 0.0
  %189 = vmatpush1.msra.mxu0 %v145
  %190 = vmatprep.subr.mxu0 0.0
  %191 = vmatpush1.msra.mxu0 %v146
  %192 = vmatprep.subr.mxu0 0.0
  %193 = vmatpush1.msra.mxu0 %v147
  %194 = vmatprep.subr.mxu0 0.0
  %195 = vmatpush1.msra.mxu0 %v148
  %196 = vmatprep.subr.mxu0 0.0
  %197 = vmatpush1.msra.mxu0 %v149
  %198 = vmatprep.subr.mxu0 0.0
  %199 = vmatpush1.msra.mxu0 %v150
  %200 = vmatprep.subr.mxu0 0.0
  %201 = vmatpush1.msra.mxu0 %v151
  %202 = vmatprep.subr.mxu0 0.0
  %203 = vmatpush1.msra.mxu0 %v152
  %204 = vmatprep.subr.mxu0 0.0
  %205 = vmatpush1.msra.mxu0 %v153
  %206 = vmatprep.subr.mxu0 0.0
  %207 = vmatpush1.msra.mxu0 %v154
  %208 = vmatprep.subr.mxu0 0.0
  %209 = vmatpush1.msra.mxu0 %v155
  %210 = vmatprep.subr.mxu0 0.0
  %211 = vmatpush1.msra.mxu0 %v156
  %212 = vmatprep.subr.mxu0 0.0
  %213 = vmatpush1.msra.mxu0 %v157
  %214 = vmatprep.subr.mxu0 0.0
  %215 = vmatpush1.msra.mxu0 %v158
  %216 = vmatprep.subr.mxu0 0.0
  %217 = vmatpush1.msra.mxu0 %v159
  %218 = vmatprep.subr.mxu0 0.0
  %219 = vmatpush1.msra.mxu0 %v160
  %220 = vmatprep.subr.mxu0 0.0
  %221 = vmatpush1.msra.mxu0 %v161
  %222 = vmatprep.subr.mxu0 0.0
  %223 = vmatpush1.msra.mxu0 %v162
  %224 = vmatprep.subr.mxu0 0.0
  %225 = vmatpush1.msra.mxu0 %v163
  %226 = vmatprep.subr.mxu0 0.0
  %227 = vmatpush1.msra.mxu0 %v164
  %228 = vmatprep.subr.mxu0 0.0
  %229 = vmatpush1.msra.mxu0 %v165
  %230 = vmatprep.subr.mxu0 0.0
  %231 = vmatpush1.msra.mxu0 %v166
  %232 = vmatprep.subr.mxu0 0.0
  %233 = vmatpush1.msra.mxu0 %v167
  %234 = vmatprep.subr.mxu0 0.0
  %235 = vmatpush1.msra.mxu0 %v168
  %236 = vmatprep.subr.mxu0 0.0
  %237 = vmatpush1.msra.mxu0 %v169
  %238 = vmatprep.subr.mxu0 0.0
  %239 = vmatpush1.msra.mxu0 %v170
  %240 = vmatprep.subr.mxu0 0.0
  %241 = vmatpush1.msra.mxu0 %v171
  %242 = vmatprep.subr.mxu0 0.0
  %243 = vmatpush1.msra.mxu0 %v172
  %244 = vmatprep.subr.mxu0 0.0
  %245 = vmatpush1.msra.mxu0 %v173
  %246 = vmatprep.subr.mxu0 0.0
  %247 = vmatpush1.msra.mxu0 %v174
  %248 = vmatprep.subr.mxu0 0.0
  %249 = vmatpush1.msra.mxu0 %v175
  %250 = vmatprep.subr.mxu0 0.0
  %251 = vmatpush1.msra.mxu0 %v176
  %252 = vmatprep.mubr.f32.mxu0 %v185
  %253 = vmatmul.mubr.f32.gmra.mrb[0].mxu0 %v184
  %v254 = vpop.f32.mrb[0].mxu0
  %v255 = vadd.f32 0.0, %v254
  %v256 = vpop.f32.mrb[0].mxu0
  %257 = vdwg.mxu0
  %v258 = vld [vmem:[%s2] sm:$0xf]
  %v261 = vunpack.c.l.s4 1983009808
  %v262 = vunpack.c.0.s8 %v261
  %v263 = vlaneseq
  %v264 = vshrl.u32 %v263, 7
  %v265 = vsub.s32 %v262, %v264
  %v266 = vrot.slane %v258, %v265
  %v267 = vcombine.high %v266, %v266
  %270 = vmatprep.subr.mxu0 0.0
  %271 = vmatpush1.msra.mxu0 %v145
  %272 = vmatprep.subr.mxu0 0.0
  %273 = vmatpush1.msra.mxu0 %v146
  %274 = vmatprep.subr.mxu0 0.0
  %275 = vmatpush1.msra.mxu0 %v147
  %276 = vmatprep.subr.mxu0 0.0
  %277 = vmatpush1.msra.mxu0 %v148
  %278 = vmatprep.subr.mxu0 0.0
  %279 = vmatpush1.msra.mxu0 %v149
  %280 = vmatprep.subr.mxu0 0.0
  %281 = vmatpush1.msra.mxu0 %v150
  %282 = vmatprep.subr.mxu0 0.0
  %283 = vmatpush1.msra.mxu0 %v151
  %284 = vmatprep.subr.mxu0 0.0
  %285 = vmatpush1.msra.mxu0 %v152
  %286 = vmatprep.subr.mxu0 0.0
  %287 = vmatpush1.msra.mxu0 %v153
  %288 = vmatprep.subr.mxu0 0.0
  %289 = vmatpush1.msra.mxu0 %v154
  %290 = vmatprep.subr.mxu0 0.0
  %291 = vmatpush1.msra.mxu0 %v155
  %292 = vmatprep.subr.mxu0 0.0
  %293 = vmatpush1.msra.mxu0 %v156
  %294 = vmatprep.subr.mxu0 0.0
  %295 = vmatpush1.msra.mxu0 %v157
  %296 = vmatprep.subr.mxu0 0.0
  %297 = vmatpush1.msra.mxu0 %v158
  %298 = vmatprep.subr.mxu0 0.0
  %299 = vmatpush1.msra.mxu0 %v159
  %300 = vmatprep.subr.mxu0 0.0
  %301 = vmatpush1.msra.mxu0 %v160
  %302 = vmatprep.subr.mxu0 0.0
  %303 = vmatpush1.msra.mxu0 %v161
  %304 = vmatprep.subr.mxu0 0.0
  %305 = vmatpush1.msra.mxu0 %v162
  %306 = vmatprep.subr.mxu0 0.0
  %307 = vmatpush1.msra.mxu0 %v163
  %308 = vmatprep.subr.mxu0 0.0
  %309 = vmatpush1.msra.mxu0 %v164
  %310 = vmatprep.subr.mxu0 0.0
  %311 = vmatpush1.msra.mxu0 %v165
  %312 = vmatprep.subr.mxu0 0.0
  %313 = vmatpush1.msra.mxu0 %v166
  %314 = vmatprep.subr.mxu0 0.0
  %315 = vmatpush1.msra.mxu0 %v167
  %316 = vmatprep.subr.mxu0 0.0
  %317 = vmatpush1.msra.mxu0 %v168
  %318 = vmatprep.subr.mxu0 0.0
  %319 = vmatpush1.msra.mxu0 %v169
  %320 = vmatprep.subr.mxu0 0.0
  %321 = vmatpush1.msra.mxu0 %v170
  %322 = vmatprep.subr.mxu0 0.0
  %323 = vmatpush1.msra.mxu0 %v171
  %324 = vmatprep.subr.mxu0 0.0
  %325 = vmatpush1.msra.mxu0 %v172
  %326 = vmatprep.subr.mxu0 0.0
  %327 = vmatpush1.msra.mxu0 %v173
  %328 = vmatprep.subr.mxu0 0.0
  %329 = vmatpush1.msra.mxu0 %v174
  %330 = vmatprep.subr.mxu0 0.0
  %331 = vmatpush1.msra.mxu0 %v175
  %332 = vmatprep.subr.mxu0 0.0
  %333 = vmatpush1.msra.mxu0 %v176
  %334 = vmatprep.mubr.f32.mxu0 %v267
  %335 = vmatmul.mubr.f32.gmra.mrb[0].mxu0 %v266
  %v336 = vpop.f32.mrb[0].mxu0
  %v337 = vadd.f32 0.0, %v336
  %v338 = vpop.f32.mrb[0].mxu0
  %339 = vdwg.mxu0
  %v340 = vld [vmem:[%s5] sm:$0x1]
  %v341 = vld [vmem:[%s6] sm:$0x1]
  %s342 = sld [smem:[#allocation2]]
  %v343 = vadd.f32 %v141, %v255
  %v345 = vlaneseq
  %v346 = vshrl.u32 %v345, 7
  %v347 = vsub.s32 0, %v346
  %v348 = vrot.slane %v340, %v347
  %v350 = vadd.f32 %v343, %v348
  %v351 = vmax.f32 %v350, 0.0
  %v352 = vadd.f32 %v141, %v337
  %v353 = vadd.f32 %v352, %v348
  %v354 = vmax.f32 %v353, 0.0
  %v356 = vlaneseq
  %v357 = vshrl.u32 %v356, 7
  %v358 = vsub.s32 0, %v357
  %v359 = vrot.slane %v341, %v358
  %v361 = vmul.f32 %v351, %v359
  %vm362 = vcmask 254976
  %v363 = vsel %vm362, %v361, 0.0
  %364 = vadd.xlane.f32.xlu0 %v363
  %v365 = vpop.xlane.xlu0 %364
  %v366 = vstv %s342
  %v367 = vadd.f32 %v365, %v366
  %v368 = vmul.f32 %v354, %v359
  %v369 = vsel %vm362, %v368, 0.0
  %370 = vadd.xlane.f32.xlu0 %v369
  %v371 = vpop.xlane.xlu0 %370
  %v372 = vadd.f32 %v371, %v366
  %v373 = vxor.u32 %v367, 2147483648
  %v374 = vmul.f32 %v373, 1.442695
  %v375 = vpow.pop %v374
  %v376 = vadd.f32 %v375, 1.0
  %v377 = vrcp.pop %v376
  %v378 = vmul.f32 1.0, %v377
  %vm379 = vcmask 1024
  %380 = vst.msk [vmem:[%s8] sm:$0x3] %vm379, %v378
  %v381 = vxor.u32 %v372, 2147483648
  %v382 = vmul.f32 %v381, 1.442695
  %v383 = vpow.pop %v382
  %v384 = vadd.f32 %v383, 1.0
  %v385 = vrcp.pop %v384
  %v386 = vmul.f32 1.0, %v385
  %vm387 = vcmask 9224
  %388 = vst.msk [vmem:[%s8] sm:$0x3] %vm387, %v386
  // Predicated region
  $region34: #{model_forward.1} parent=0 // pred_check
    _
  $region35: #{model_forward.1} parent=0 // pred_check_branch
    %390 = sbr.rel (0) target = $region37
  $region36: #{model_forward.1} parent=0 // pred_region
    _
  $region37: #{model_forward.1} parent=0 // pred_fallthru
    _
  // Predicated region
  $region38: #{model_forward.1} parent=0 // pred_check
    _
  $region39: #{model_forward.1} parent=0 // pred_check_branch
    %392 = sbr.rel (0) target = $region41
  $region40: #{model_forward.1} parent=0 // pred_region
    _
  $region41: #{model_forward.1} parent=0 // pred_fallthru
    _

</llo_original>
